<compile_context>
chip_gen: v7x
topology: tpu7x:2x2x1
jax: 0.10.0
libtpu: 0.0.40
codegen_flags: <defaults>
</compile_context>

<pallas_src>
import functools

import jax
import jax.numpy as jnp
from jax import lax
from jax.experimental import pallas as pl
from jax.experimental.pallas import tpu as pltpu


_BN_EPS = 1e-5


def _round_up(a, b):
    return (a + b - 1) // b * b


# ---------------------------------------------------------------------------
# Fused Pallas kernel: k x k conv (stride 1) + folded BatchNorm affine + ReLU
# ---------------------------------------------------------------------------
def _conv_bn_relu_kernel(xl_ref, xc_ref, xr_ref, w_ref, scale_ref, bias_ref,
                         o_ref, *, wp, k, tm):
    """One (batch b, M-tile g) grid step.

    xl/xc/xr : (1, Cin, tm) bf16  left / centre / right blocks of the
                                  flattened padded image (halo via BlockSpec).
    w        : (Cout, k*k*Cin) bf16, tap-major / channel-minor.
    scale/bias: (Cout, 1) f32     folded BatchNorm (inference) affine.
    o        : (1, Cout, tm) f32  lane-dense output tile.
    """
    r = k // 2
    cin = xc_ref.shape[1]
    cout = w_ref.shape[0]

    # 3-block halo window along the flattened-spatial (lane) axis.
    window = jnp.concatenate([xl_ref[0], xc_ref[0], xr_ref[0]], axis=-1)
    wmat = w_ref[...]                                    # (Cout, k*k*Cin) bf16

    acc = jnp.zeros((cout, tm), jnp.float32)
    # Fold the k*k taps into an in-VMEM K-loop over shifted views (no im2col).
    for t in range(k * k):
        dy, dx = t // k, t % k
        off = tm + (dy - r) * wp + (dx - r)              # static lane offset
        a_t = window[:, off:off + tm]                    # (Cin, tm)  bf16
        w_t = wmat[:, t * cin:(t + 1) * cin]             # (Cout, Cin) bf16
        acc += jnp.dot(w_t, a_t, preferred_element_type=jnp.float32)

    y = acc * scale_ref[...] + bias_ref[...]             # BN (inference) affine
    o_ref[0] = jnp.maximum(y, 0.0)                       # ReLU


# ---------------------------------------------------------------------------
# Wrapper: ConvolutionalBlock forward (NCHW in, NCHW out, PyTorch semantics)
# ---------------------------------------------------------------------------
def conv_bn_relu(x, params, *, padding=1, eps=_BN_EPS):
    """Conv2d(k x k, stride 1, `padding`) + BatchNorm2d(eval) + ReLU.

    x: (B, Cin, H, W) float32 (NCHW).  Returns (B, Cout, Ho, Wo) float32,
    Ho = H + 2*padding - k + 1.
    """
    B, Cin, H, W = x.shape
    w = params["w"]                                      # (Cout, Cin, k, k)
    Cout, Cin_w, k, k2 = w.shape
    assert Cin_w == Cin and k == k2 and k % 2 == 1, "odd square kernel only"
    r = k // 2
    Hp, Wp = H + 2 * padding, W + 2 * padding
    Ho, Wo = Hp - k + 1, Wp - k + 1
    m_img = Hp * Wp

    # Tile size: largest tile (<= 512) whose halo fits one block and that
    # still leaves >= 2 grid steps (v7x megacore).
    tm = _round_up(r * (Wp + 1) + 1, 128)
    while tm < 512 and pl.cdiv(m_img, 2 * tm) >= 2:
        tm *= 2
    assert tm >= r * (Wp + 1) + 1, "image rows too wide for single-block halo"
    g_m = pl.cdiv(m_img, tm)
    m_pad = g_m * tm
    cin_p = _round_up(Cin, 8)                            # sublane alignment

    # ---- layout prep (cheap glue: pads + free reshapes, no transposes) ----
    xp = jnp.pad(x, ((0, 0), (0, cin_p - Cin),
                     (padding, padding), (padding, padding)))
    x_flat = xp.reshape(B, cin_p, m_img)
    x_flat = jnp.pad(x_flat, ((0, 0), (0, 0), (0, m_pad - m_img)))
    x_flat = x_flat.astype(jnp.bfloat16)

    wt = jnp.transpose(w, (0, 2, 3, 1))                  # (Cout, k, k, Cin)
    wt = jnp.pad(wt, ((0, 0), (0, 0), (0, 0), (0, cin_p - Cin)))
    w_mat = wt.reshape(Cout, k * k * cin_p).astype(jnp.bfloat16)

    # Fold conv bias + BatchNorm running stats into a single per-channel affine.
    scale = params["gamma"] / jnp.sqrt(params["var"] + eps)
    bias = (params["b"] - params["mean"]) * scale + params["beta"]
    scale2 = scale.reshape(Cout, 1).astype(jnp.float32)
    bias2 = bias.reshape(Cout, 1).astype(jnp.float32)

    kern = functools.partial(_conv_bn_relu_kernel, wp=Wp, k=k, tm=tm)
    last = g_m - 1
    out = pl.pallas_call(
        kern,
        out_shape=jax.ShapeDtypeStruct((B, Cout, m_pad), jnp.float32),
        grid=(B, g_m),
        in_specs=[
            # same flattened input three times: left / centre / right halo
            pl.BlockSpec((1, cin_p, tm),
                         lambda b, g: (b, 0, jnp.maximum(g - 1, 0))),
            pl.BlockSpec((1, cin_p, tm), lambda b, g: (b, 0, g)),
            pl.BlockSpec((1, cin_p, tm),
                         lambda b, g: (b, 0, jnp.minimum(g + 1, last))),
            pl.BlockSpec((Cout, k * k * cin_p), lambda b, g: (0, 0)),
            pl.BlockSpec((Cout, 1), lambda b, g: (0, 0)),
            pl.BlockSpec((Cout, 1), lambda b, g: (0, 0)),
        ],
        out_specs=pl.BlockSpec((1, Cout, tm), lambda b, g: (b, 0, g)),
        compiler_params=pltpu.CompilerParams(
            dimension_semantics=("parallel", "parallel"),
            vmem_limit_bytes=32 * 1024 * 1024),
    )(x_flat, x_flat, x_flat, w_mat, scale2, bias2)

    # Valid conv outputs are the interior of the padded grid (crop required by
    # conv semantics anyway); border / tile-tail lanes are discarded here.
    y = out[:, :, :m_img].reshape(B, Cout, Hp, Wp)
    return y[:, :, r:r + Ho, r:r + Wo]


# ---------------------------------------------------------------------------
# Pure-JAX reference (different code path) for validation
# ---------------------------------------------------------------------------
def _reference(x, params, padding=1, eps=_BN_EPS):
    conv = lax.conv_general_dilated(
        x, params["w"], window_strides=(1, 1),
        padding=[(padding, padding), (padding, padding)],
        dimension_numbers=("NCHW", "OIHW", "NCHW"))
    conv = conv + params["b"][None, :, None, None]
    bn = (params["gamma"][None, :, None, None]
          * (conv - params["mean"][None, :, None, None])
          / jnp.sqrt(params["var"][None, :, None, None] + eps)
          + params["beta"][None, :, None, None])
    return jnp.maximum(bn, 0.0)


# ---------------------------------------------------------------------------
# Example run
# ---------------------------------------------------------------------------
if __name__ == "__main__":
    key = jax.random.PRNGKey(0)
    kx, kw, kb, kg, kbe, km, kv = jax.random.split(key, 7)

    # ConvolutionalBlock(in_channels=4, out_channels=8, kernel_size=3, padding=1)
    B, Cin, H, W = 2, 4, 16, 16
    Cout, k = 8, 3

    x = jax.random.normal(kx, (B, Cin, H, W), dtype=jnp.float32)
    params = {
        "w": 0.1 * jax.random.normal(kw, (Cout, Cin, k, k), dtype=jnp.float32),
        "b": 0.1 * jax.random.normal(kb, (Cout,), dtype=jnp.float32),
        "gamma": 1.0 + 0.1 * jax.random.normal(kg, (Cout,), dtype=jnp.float32),
        "beta": 0.1 * jax.random.normal(kbe, (Cout,), dtype=jnp.float32),
        "mean": 0.1 * jax.random.normal(km, (Cout,), dtype=jnp.float32),
        "var": 0.5 + jax.random.uniform(kv, (Cout,), dtype=jnp.float32),
    }

    fwd = jax.jit(functools.partial(conv_bn_relu, padding=1))
    out = jax.block_until_ready(fwd(x, params))

    assert out.shape == (B, Cout, H, W), out.shape
    assert bool(jnp.all(jnp.isfinite(out)))

    ref = _reference(x, params, padding=1)
    err = float(jnp.max(jnp.abs(out - ref)))
    assert err < 3e-2, f"max abs error vs reference: {err}"

    print("KERNEL_OK")
</pallas_src>

<mosaic_0001>
module attributes {stable_mosaic.version = 11 : i64} {
  func.func @_conv_bn_relu_kernel(%arg0: i32, %arg1: i32, %arg2: memref<1x8x256xbf16, #tpu.memory_space<vmem>>, %arg3: memref<1x8x256xbf16, #tpu.memory_space<vmem>>, %arg4: memref<1x8x256xbf16, #tpu.memory_space<vmem>>, %arg5: memref<8x72xbf16, #tpu.memory_space<vmem>>, %arg6: memref<8x1xf32, #tpu.memory_space<vmem>>, %arg7: memref<8x1xf32, #tpu.memory_space<vmem>>, %arg8: memref<1x8x256xf32, #tpu.memory_space<vmem>>) attributes {dimension_semantics = [#tpu.dimension_semantics<parallel>, #tpu.dimension_semantics<parallel>], iteration_bounds = array<i64: 2, 2>, scalar_prefetch = 0 : i64, scratch_operands = 0 : i64, tpu.core_type = #tpu.core_type<tc>, window_params = [{transform_indices = @transform_0, window_bounds = array<i64: 1, 8, 256>}, {transform_indices = @transform_1, window_bounds = array<i64: 1, 8, 256>}, {transform_indices = @transform_2, window_bounds = array<i64: 1, 8, 256>}, {pipeline_mode = #tpu.pipeline_mode<synchronous>, transform_indices = @transform_3, window_bounds = array<i64: 8, 72>}, {pipeline_mode = #tpu.pipeline_mode<synchronous>, transform_indices = @transform_4, window_bounds = array<i64: 8, 1>}, {pipeline_mode = #tpu.pipeline_mode<synchronous>, transform_indices = @transform_5, window_bounds = array<i64: 8, 1>}, {transform_indices = @transform_6, window_bounds = array<i64: 1, 8, 256>}]} {
    %c0 = arith.constant 0 : index
    %c0_0 = arith.constant 0 : index
    %c0_1 = arith.constant 0 : index
    %0 = vector.load %arg2[%c0, %c0_0, %c0_1] : memref<1x8x256xbf16, #tpu.memory_space<vmem>>, vector<1x8x256xbf16>
    %1 = vector.shape_cast %0 : vector<1x8x256xbf16> to vector<8x256xbf16>
    %c0_2 = arith.constant 0 : index
    %c0_3 = arith.constant 0 : index
    %c0_4 = arith.constant 0 : index
    %2 = vector.load %arg3[%c0_2, %c0_3, %c0_4] : memref<1x8x256xbf16, #tpu.memory_space<vmem>>, vector<1x8x256xbf16>
    %3 = vector.shape_cast %2 : vector<1x8x256xbf16> to vector<8x256xbf16>
    %c0_5 = arith.constant 0 : index
    %c0_6 = arith.constant 0 : index
    %c0_7 = arith.constant 0 : index
    %4 = vector.load %arg4[%c0_5, %c0_6, %c0_7] : memref<1x8x256xbf16, #tpu.memory_space<vmem>>, vector<1x8x256xbf16>
    %5 = vector.shape_cast %4 : vector<1x8x256xbf16> to vector<8x256xbf16>
    %6 = tpu.concatenate %1, %3, %5 in 1 : vector<8x256xbf16>, vector<8x256xbf16>, vector<8x256xbf16> -> vector<8x768xbf16>
    %c0_8 = arith.constant 0 : index
    %c0_9 = arith.constant 0 : index
    %7 = vector.load %arg5[%c0_8, %c0_9] : memref<8x72xbf16, #tpu.memory_space<vmem>>, vector<8x72xbf16>
    %cst = arith.constant 0.000000e+00 : f32
    %8 = vector.broadcast %cst : f32 to vector<8x256xf32>
    %9 = vector.extract_strided_slice %6 {offsets = [0, 237], sizes = [8, 256], strides = [1, 1]} : vector<8x768xbf16> to vector<8x256xbf16>
    %10 = vector.extract_strided_slice %7 {offsets = [0, 0], sizes = [8, 8], strides = [1, 1]} : vector<8x72xbf16> to vector<8x8xbf16>
    %cst_10 = arith.constant dense<0.000000e+00> : vector<8x256xf32>
    %11 = tpu.matmul %10, %9, %cst_10 {dimension_numbers = #tpu.dot_dimension_numbers<[1], [0], [0], [1], [0, 0, 1, 1], [], []>} : vector<8x8xbf16>, vector<8x256xbf16>, vector<8x256xf32> -> vector<8x256xf32>
    %12 = arith.addf %8, %11 : vector<8x256xf32>
    %13 = vector.extract_strided_slice %6 {offsets = [0, 238], sizes = [8, 256], strides = [1, 1]} : vector<8x768xbf16> to vector<8x256xbf16>
    %14 = vector.extract_strided_slice %7 {offsets = [0, 8], sizes = [8, 8], strides = [1, 1]} : vector<8x72xbf16> to vector<8x8xbf16>
    %cst_11 = arith.constant dense<0.000000e+00> : vector<8x256xf32>
    %15 = tpu.matmul %14, %13, %cst_11 {dimension_numbers = #tpu.dot_dimension_numbers<[1], [0], [0], [1], [0, 0, 1, 1], [], []>} : vector<8x8xbf16>, vector<8x256xbf16>, vector<8x256xf32> -> vector<8x256xf32>
    %16 = arith.addf %12, %15 : vector<8x256xf32>
    %17 = vector.extract_strided_slice %6 {offsets = [0, 239], sizes = [8, 256], strides = [1, 1]} : vector<8x768xbf16> to vector<8x256xbf16>
    %18 = vector.extract_strided_slice %7 {offsets = [0, 16], sizes = [8, 8], strides = [1, 1]} : vector<8x72xbf16> to vector<8x8xbf16>
    %cst_12 = arith.constant dense<0.000000e+00> : vector<8x256xf32>
    %19 = tpu.matmul %18, %17, %cst_12 {dimension_numbers = #tpu.dot_dimension_numbers<[1], [0], [0], [1], [0, 0, 1, 1], [], []>} : vector<8x8xbf16>, vector<8x256xbf16>, vector<8x256xf32> -> vector<8x256xf32>
    %20 = arith.addf %16, %19 : vector<8x256xf32>
    %21 = vector.extract_strided_slice %6 {offsets = [0, 255], sizes = [8, 256], strides = [1, 1]} : vector<8x768xbf16> to vector<8x256xbf16>
    %22 = vector.extract_strided_slice %7 {offsets = [0, 24], sizes = [8, 8], strides = [1, 1]} : vector<8x72xbf16> to vector<8x8xbf16>
    %cst_13 = arith.constant dense<0.000000e+00> : vector<8x256xf32>
    %23 = tpu.matmul %22, %21, %cst_13 {dimension_numbers = #tpu.dot_dimension_numbers<[1], [0], [0], [1], [0, 0, 1, 1], [], []>} : vector<8x8xbf16>, vector<8x256xbf16>, vector<8x256xf32> -> vector<8x256xf32>
    %24 = arith.addf %20, %23 : vector<8x256xf32>
    %25 = vector.extract_strided_slice %6 {offsets = [0, 256], sizes = [8, 256], strides = [1, 1]} : vector<8x768xbf16> to vector<8x256xbf16>
    %26 = vector.extract_strided_slice %7 {offsets = [0, 32], sizes = [8, 8], strides = [1, 1]} : vector<8x72xbf16> to vector<8x8xbf16>
    %cst_14 = arith.constant dense<0.000000e+00> : vector<8x256xf32>
    %27 = tpu.matmul %26, %25, %cst_14 {dimension_numbers = #tpu.dot_dimension_numbers<[1], [0], [0], [1], [0, 0, 1, 1], [], []>} : vector<8x8xbf16>, vector<8x256xbf16>, vector<8x256xf32> -> vector<8x256xf32>
    %28 = arith.addf %24, %27 : vector<8x256xf32>
    %29 = vector.extract_strided_slice %6 {offsets = [0, 257], sizes = [8, 256], strides = [1, 1]} : vector<8x768xbf16> to vector<8x256xbf16>
    %30 = vector.extract_strided_slice %7 {offsets = [0, 40], sizes = [8, 8], strides = [1, 1]} : vector<8x72xbf16> to vector<8x8xbf16>
    %cst_15 = arith.constant dense<0.000000e+00> : vector<8x256xf32>
    %31 = tpu.matmul %30, %29, %cst_15 {dimension_numbers = #tpu.dot_dimension_numbers<[1], [0], [0], [1], [0, 0, 1, 1], [], []>} : vector<8x8xbf16>, vector<8x256xbf16>, vector<8x256xf32> -> vector<8x256xf32>
    %32 = arith.addf %28, %31 : vector<8x256xf32>
    %33 = vector.extract_strided_slice %6 {offsets = [0, 273], sizes = [8, 256], strides = [1, 1]} : vector<8x768xbf16> to vector<8x256xbf16>
    %34 = vector.extract_strided_slice %7 {offsets = [0, 48], sizes = [8, 8], strides = [1, 1]} : vector<8x72xbf16> to vector<8x8xbf16>
    %cst_16 = arith.constant dense<0.000000e+00> : vector<8x256xf32>
    %35 = tpu.matmul %34, %33, %cst_16 {dimension_numbers = #tpu.dot_dimension_numbers<[1], [0], [0], [1], [0, 0, 1, 1], [], []>} : vector<8x8xbf16>, vector<8x256xbf16>, vector<8x256xf32> -> vector<8x256xf32>
    %36 = arith.addf %32, %35 : vector<8x256xf32>
    %37 = vector.extract_strided_slice %6 {offsets = [0, 274], sizes = [8, 256], strides = [1, 1]} : vector<8x768xbf16> to vector<8x256xbf16>
    %38 = vector.extract_strided_slice %7 {offsets = [0, 56], sizes = [8, 8], strides = [1, 1]} : vector<8x72xbf16> to vector<8x8xbf16>
    %cst_17 = arith.constant dense<0.000000e+00> : vector<8x256xf32>
    %39 = tpu.matmul %38, %37, %cst_17 {dimension_numbers = #tpu.dot_dimension_numbers<[1], [0], [0], [1], [0, 0, 1, 1], [], []>} : vector<8x8xbf16>, vector<8x256xbf16>, vector<8x256xf32> -> vector<8x256xf32>
    %40 = arith.addf %36, %39 : vector<8x256xf32>
    %41 = vector.extract_strided_slice %6 {offsets = [0, 275], sizes = [8, 256], strides = [1, 1]} : vector<8x768xbf16> to vector<8x256xbf16>
    %42 = vector.extract_strided_slice %7 {offsets = [0, 64], sizes = [8, 8], strides = [1, 1]} : vector<8x72xbf16> to vector<8x8xbf16>
    %cst_18 = arith.constant dense<0.000000e+00> : vector<8x256xf32>
    %43 = tpu.matmul %42, %41, %cst_18 {dimension_numbers = #tpu.dot_dimension_numbers<[1], [0], [0], [1], [0, 0, 1, 1], [], []>} : vector<8x8xbf16>, vector<8x256xbf16>, vector<8x256xf32> -> vector<8x256xf32>
    %44 = arith.addf %40, %43 : vector<8x256xf32>
    %c0_19 = arith.constant 0 : index
    %c0_20 = arith.constant 0 : index
    %45 = vector.load %arg6[%c0_19, %c0_20] : memref<8x1xf32, #tpu.memory_space<vmem>>, vector<8x1xf32>
    %46 = vector.broadcast %45 : vector<8x1xf32> to vector<8x256xf32>
    %47 = arith.mulf %44, %46 : vector<8x256xf32>
    %c0_21 = arith.constant 0 : index
    %c0_22 = arith.constant 0 : index
    %48 = vector.load %arg7[%c0_21, %c0_22] : memref<8x1xf32, #tpu.memory_space<vmem>>, vector<8x1xf32>
    %49 = vector.broadcast %48 : vector<8x1xf32> to vector<8x256xf32>
    %50 = arith.addf %47, %49 : vector<8x256xf32>
    %cst_23 = arith.constant 0.000000e+00 : f32
    %51 = vector.broadcast %cst_23 : f32 to vector<8x256xf32>
    %52 = arith.maximumf %50, %51 : vector<8x256xf32>
    %c0_24 = arith.constant 0 : index
    %c0_25 = arith.constant 0 : index
    %c0_26 = arith.constant 0 : index
    %53 = vector.load %arg8[%c0_24, %c0_25, %c0_26] : memref<1x8x256xf32, #tpu.memory_space<vmem>>, vector<1x8x256xf32>
    %54 = vector.shape_cast %53 : vector<1x8x256xf32> to vector<8x256xf32>
    %55 = vector.shape_cast %52 : vector<8x256xf32> to vector<1x8x256xf32>
    tpu.vector_store %arg8[%c0_24, %c0_25, %c0_26], %55 {strides = array<i32>} : memref<1x8x256xf32, #tpu.memory_space<vmem>>, vector<1x8x256xf32>,
    return
  }
  func.func @transform_0(%arg0: i32, %arg1: i32) -> (i32, i32, i32) {
    %c1_i32 = arith.constant 1 : i32
    %0 = arith.subi %arg1, %c1_i32 : i32
    %c0_i32 = arith.constant 0 : i32
    %1 = arith.maxsi %0, %c0_i32 : i32
    %c0_i32_0 = arith.constant 0 : i32
    %c0_i32_1 = arith.constant 0 : i32
    return %arg0, %c0_i32_0, %1 : i32, i32, i32
  }
  func.func @transform_1(%arg0: i32, %arg1: i32) -> (i32, i32, i32) {
    %c0_i32 = arith.constant 0 : i32
    %c0_i32_0 = arith.constant 0 : i32
    return %arg0, %c0_i32, %arg1 : i32, i32, i32
  }
  func.func @transform_2(%arg0: i32, %arg1: i32) -> (i32, i32, i32) {
    %c1_i32 = arith.constant 1 : i32
    %0 = arith.addi %arg1, %c1_i32 : i32
    %c1_i32_0 = arith.constant 1 : i32
    %1 = arith.minsi %0, %c1_i32_0 : i32
    %c0_i32 = arith.constant 0 : i32
    %c0_i32_1 = arith.constant 0 : i32
    return %arg0, %c0_i32, %1 : i32, i32, i32
  }
  func.func @transform_3(%arg0: i32, %arg1: i32) -> (i32, i32) {
    %c0_i32 = arith.constant 0 : i32
    %c0_i32_0 = arith.constant 0 : i32
    %c0_i32_1 = arith.constant 0 : i32
    return %c0_i32, %c0_i32_0 : i32, i32
  }
  func.func @transform_4(%arg0: i32, %arg1: i32) -> (i32, i32) {
    %c0_i32 = arith.constant 0 : i32
    %c0_i32_0 = arith.constant 0 : i32
    %c0_i32_1 = arith.constant 0 : i32
    return %c0_i32, %c0_i32_0 : i32, i32
  }
  func.func @transform_5(%arg0: i32, %arg1: i32) -> (i32, i32) {
    %c0_i32 = arith.constant 0 : i32
    %c0_i32_0 = arith.constant 0 : i32
    %c0_i32_1 = arith.constant 0 : i32
    return %c0_i32, %c0_i32_0 : i32, i32
  }
  func.func @transform_6(%arg0: i32, %arg1: i32) -> (i32, i32, i32) {
    %c0_i32 = arith.constant 0 : i32
    %c0_i32_0 = arith.constant 0 : i32
    return %arg0, %c0_i32, %arg1 : i32, i32, i32
  }
}

</mosaic_0001>

<llo_original>
// kernel: conv_bn_relu.1
$region0: #{conv_bn_relu.1}
  #allocation0 [shape = 'u32[]', space=smem, size = 0x4, offset = 0x4, fixed_abs, tag = 'smem constant byte address 0x4 - core index']
  #allocation1 [shape = 'u32[144,128]{1,0:T(1,128)}', space=vmem, size = 0x12000, scoped, tag = 'internal scratch']
  %s0 = inlined_call_operand.vmem [shape: bf16[2,8,512], index: 0, kind: input, shape index: {}, may-alias: {0,1,2}]
  %s1 = inlined_call_operand.vmem [shape: bf16[2,8,512], index: 1, kind: input, shape index: {}, may-alias: {0,1,2}]
  %s2 = inlined_call_operand.vmem [shape: bf16[2,8,512], index: 2, kind: input, shape index: {}, may-alias: {0,1,2}]
  %s3 = inlined_call_operand.vmem [shape: bf16[8,72], index: 3, kind: input, shape index: {}]
  %s4 = inlined_call_operand.vmem [shape: f32[8,1], index: 4, kind: input, shape index: {}]
  %s5 = inlined_call_operand.vmem [shape: f32[8,1], index: 5, kind: input, shape index: {}]
  %s6 = inlined_call_operand.vmem [shape: f32[2,8,512], index: 6, kind: output, shape index: {}]
  %s7 = sld [smem:[#allocation0]]
  $region57: #{conv_bn_relu.1} parent=0
    _
  %s9 = ssub.s32 1, %s7
  %s10 = scalar_select 0, %s9, %s7
  loop: start=0, step=1, limit=6
  $region2: #{conv_bn_relu.1} parent=0 // loop_pre_header
    _
  $region3: #{conv_bn_relu.1} parent=0 // loop_header
    %s12 = sphi 0, %s16
    %p13 = scmp.ge.s32.totalorder %s12, 6
    %s19 = sphi 0, %s31
    %s20 = sphi 0, %s27
    %s21 = sphi 0, %s19
    %s22 = sphi 0, %s20
    %s23 = sphi 0, %s21
    %s24 = sphi 0, %s22
    %s42 = sphi 0, %s44
    %s45 = sphi 0, %s42
    %s46 = sphi 0, %s45
    %s62 = sphi 0, %s46
    %s70 = sphi 0, %s72
    %s73 = sphi 0, %s70
    %s74 = sphi 0, %s73
    %s90 = sphi 0, %s74
    %s104 = sphi 0, %s106
    %s107 = sphi 0, %s104
    %s108 = sphi 0, %s107
    %s124 = sphi 0, %s108
    %s128 = sphi 0, %s128
    %s130 = sphi 0, %s128
    %s131 = sphi 0, %s130
    %s145 = sphi 0, %s131
    %s149 = sphi 0, %s149
    %s151 = sphi 0, %s149
    %s152 = sphi 0, %s151
    %s166 = sphi 0, %s152
    %s170 = sphi 0, %s170
    %s172 = sphi 0, %s170
    %s173 = sphi 0, %s172
    %s187 = sphi 0, %s173
    %s195 = sphi 0, %s197
    %s198 = sphi 0, %s195
    %s199 = sphi 0, %s198
    %s215 = sphi 0, %s199
  $region4: #{conv_bn_relu.1} parent=0 // loop_header_branch
    %15 = sbr.rel (%p13) target = $region8
  $region5: #{conv_bn_relu.1} parent=0 // loop_body
    %s17 = ssub.s32 %s12, 1
    %s18 = ssub.s32 %s12, 2
    %s25 = sadd.s32 1, %s20
    %p26 = scmp.ge.s32.totalorder %s25, 2
    %s27 = scalar_select %p26, 0, %s25
    %s28 = sadd.s32 1, %s19
    %s29 = scalar_select %p26, %s28, %s19
    %p30 = scmp.ge.s32.totalorder %s29, 2
    %s31 = scalar_select %p30, 0, %s29
    %s32 = ssub.s32 %s20, 1
    %p33 = scmp.gt.s32.totalorder %s32, 0
    %s34 = scalar_select %p33, %s32, 0
    %s35 = ssub.s32 %s27, 1
    %p36 = scmp.gt.s32.totalorder %s35, 0
    %s37 = scalar_select %p36, %s35, 0
    %s38 = ssub.s32 %s19, %s31
    %s39 = ssub.s32 %s34, %s37
    %s40 = sor.u32 %s38, %s39
    %p41 = scmp.eq.s32.totalorder %s40, 0
    %s43 = sadd.s32 %s42, 1
    %s44 = scalar_select %p41, %s42, %s43
    %p47 = pneg %p41
    %p48 = scmp.eq.s32.totalorder %s12, 3
    %p49 = por %p47, %p48
    %p50 = scmp.ne.s32.totalorder %s42, %s45
    %p51 = scmp.eq.s32.totalorder %s12, 0
    %p52 = por %p50, %p51
    %p53 = scmp.ne.s32.totalorder %s42, %s45
    %p54 = scmp.eq.s32.totalorder %s17, 3
    %p55 = por %p53, %p54
    %p56 = scmp.ne.s32.totalorder %s45, %s46
    %p57 = scmp.eq.s32.totalorder %s17, 0
    %p58 = por %p56, %p57
    %p59 = scmp.ne.s32.totalorder %s45, %s46
    %p60 = scmp.eq.s32.totalorder %s18, 3
    %p61 = por %p59, %p60
    %p63 = scmp.ne.s32.totalorder %s46, %s62
    %p64 = scmp.eq.s32.totalorder %s18, 0
    %p65 = por %p63, %p64
    %s66 = ssub.s32 %s19, %s31
    %s67 = ssub.s32 %s20, %s27
    %s68 = sor.u32 %s66, %s67
    %p69 = scmp.eq.s32.totalorder %s68, 0
    %s71 = sadd.s32 %s70, 1
    %s72 = scalar_select %p69, %s70, %s71
    %p75 = pneg %p69
    %p76 = scmp.eq.s32.totalorder %s12, 3
    %p77 = por %p75, %p76
    %p78 = scmp.ne.s32.totalorder %s70, %s73
    %p79 = scmp.eq.s32.totalorder %s12, 0
    %p80 = por %p78, %p79
    %p81 = scmp.ne.s32.totalorder %s70, %s73
    %p82 = scmp.eq.s32.totalorder %s17, 3
    %p83 = por %p81, %p82
    %p84 = scmp.ne.s32.totalorder %s73, %s74
    %p85 = scmp.eq.s32.totalorder %s17, 0
    %p86 = por %p84, %p85
    %p87 = scmp.ne.s32.totalorder %s73, %s74
    %p88 = scmp.eq.s32.totalorder %s18, 3
    %p89 = por %p87, %p88
    %p91 = scmp.ne.s32.totalorder %s74, %s90
    %p92 = scmp.eq.s32.totalorder %s18, 0
    %p93 = por %p91, %p92
    %s94 = sadd.s32 %s20, 1
    %p95 = scmp.lt.s32.totalorder %s94, 1
    %s96 = scalar_select %p95, %s94, 1
    %s97 = sadd.s32 %s27, 1
    %p98 = scmp.lt.s32.totalorder %s97, 1
    %s99 = scalar_select %p98, %s97, 1
    %s100 = ssub.s32 %s19, %s31
    %s101 = ssub.s32 %s96, %s99
    %s102 = sor.u32 %s100, %s101
    %p103 = scmp.eq.s32.totalorder %s102, 0
    %s105 = sadd.s32 %s104, 1
    %s106 = scalar_select %p103, %s104, %s105
    %p109 = pneg %p103
    %p110 = scmp.eq.s32.totalorder %s12, 3
    %p111 = por %p109, %p110
    %p112 = scmp.ne.s32.totalorder %s104, %s107
    %p113 = scmp.eq.s32.totalorder %s12, 0
    %p114 = por %p112, %p113
    %p115 = scmp.ne.s32.totalorder %s104, %s107
    %p116 = scmp.eq.s32.totalorder %s17, 3
    %p117 = por %p115, %p116
    %p118 = scmp.ne.s32.totalorder %s107, %s108
    %p119 = scmp.eq.s32.totalorder %s17, 0
    %p120 = por %p118, %p119
    %p121 = scmp.ne.s32.totalorder %s107, %s108
    %p122 = scmp.eq.s32.totalorder %s18, 3
    %p123 = por %p121, %p122
    %p125 = scmp.ne.s32.totalorder %s108, %s124
    %p126 = scmp.eq.s32.totalorder %s18, 0
    %p127 = por %p125, %p126
    %s129 = sadd.s32 %s128, 1
    %p132 = scmp.eq.s32.totalorder %s12, 3
    %p133 = scmp.ne.s32.totalorder %s128, %s130
    %p134 = scmp.eq.s32.totalorder %s12, 0
    %p135 = por %p133, %p134
    %p136 = scmp.ne.s32.totalorder %s128, %s130
    %p137 = scmp.eq.s32.totalorder %s17, 3
    %p138 = por %p136, %p137
    %p139 = scmp.ne.s32.totalorder %s130, %s131
    %p140 = scmp.eq.s32.totalorder %s17, 0
    %p141 = por %p139, %p140
    %p142 = scmp.ne.s32.totalorder %s130, %s131
    %p143 = scmp.eq.s32.totalorder %s18, 3
    %p144 = por %p142, %p143
    %p146 = scmp.ne.s32.totalorder %s131, %s145
    %p147 = scmp.eq.s32.totalorder %s18, 0
    %p148 = por %p146, %p147
    %s150 = sadd.s32 %s149, 1
    %p153 = scmp.eq.s32.totalorder %s12, 3
    %p154 = scmp.ne.s32.totalorder %s149, %s151
    %p155 = scmp.eq.s32.totalorder %s12, 0
    %p156 = por %p154, %p155
    %p157 = scmp.ne.s32.totalorder %s149, %s151
    %p158 = scmp.eq.s32.totalorder %s17, 3
    %p159 = por %p157, %p158
    %p160 = scmp.ne.s32.totalorder %s151, %s152
    %p161 = scmp.eq.s32.totalorder %s17, 0
    %p162 = por %p160, %p161
    %p163 = scmp.ne.s32.totalorder %s151, %s152
    %p164 = scmp.eq.s32.totalorder %s18, 3
    %p165 = por %p163, %p164
    %p167 = scmp.ne.s32.totalorder %s152, %s166
    %p168 = scmp.eq.s32.totalorder %s18, 0
    %p169 = por %p167, %p168
    %s171 = sadd.s32 %s170, 1
    %p174 = scmp.eq.s32.totalorder %s12, 3
    %p175 = scmp.ne.s32.totalorder %s170, %s172
    %p176 = scmp.eq.s32.totalorder %s12, 0
    %p177 = por %p175, %p176
    %p178 = scmp.ne.s32.totalorder %s170, %s172
    %p179 = scmp.eq.s32.totalorder %s17, 3
    %p180 = por %p178, %p179
    %p181 = scmp.ne.s32.totalorder %s172, %s173
    %p182 = scmp.eq.s32.totalorder %s17, 0
    %p183 = por %p181, %p182
    %p184 = scmp.ne.s32.totalorder %s172, %s173
    %p185 = scmp.eq.s32.totalorder %s18, 3
    %p186 = por %p184, %p185
    %p188 = scmp.ne.s32.totalorder %s173, %s187
    %p189 = scmp.eq.s32.totalorder %s18, 0
    %p190 = por %p188, %p189
    %s191 = ssub.s32 %s19, %s31
    %s192 = ssub.s32 %s20, %s27
    %s193 = sor.u32 %s191, %s192
    %p194 = scmp.eq.s32.totalorder %s193, 0
    %s196 = sadd.s32 %s195, 1
    %s197 = scalar_select %p194, %s195, %s196
    %p200 = pneg %p194
    %p201 = scmp.eq.s32.totalorder %s12, 3
    %p202 = por %p200, %p201
    %p203 = scmp.ne.s32.totalorder %s195, %s198
    %p204 = scmp.eq.s32.totalorder %s12, 0
    %p205 = por %p203, %p204
    %p206 = scmp.ne.s32.totalorder %s195, %s198
    %p207 = scmp.eq.s32.totalorder %s17, 3
    %p208 = por %p206, %p207
    %p209 = scmp.ne.s32.totalorder %s198, %s199
    %p210 = scmp.eq.s32.totalorder %s17, 0
    %p211 = por %p209, %p210
    %p212 = scmp.ne.s32.totalorder %s198, %s199
    %p213 = scmp.eq.s32.totalorder %s18, 3
    %p214 = por %p212, %p213
    %p216 = scmp.ne.s32.totalorder %s199, %s215
    %p217 = scmp.eq.s32.totalorder %s18, 0
    %p218 = por %p216, %p217
    %p219 = scmp.le.s32.totalorder 1, %s12
    %p220 = scmp.lt.s32.totalorder %s12, 5
    %p221 = pnand %p219, %p220
    %p222 = pneg %p221
    // Predicated region
    $region9: #{conv_bn_relu.1} parent=5 // pred_check
      _
    $region10: #{conv_bn_relu.1} parent=5 // pred_check_branch
      %224 = sbr.rel (%p221) target = $region12
    $region11: #{conv_bn_relu.1} parent=5 // pred_region
      %s225 = ssub.s32 %s12, 1
      // Predicated region
      $region13: #{conv_bn_relu.1} parent=11 // pred_check
        %p226 = pneg %p141
      $region14: #{conv_bn_relu.1} parent=11 // pred_check_branch
        %228 = sbr.rel (%p226) target = $region16
      $region15: #{conv_bn_relu.1} parent=11 // pred_region
        _
      $region16: #{conv_bn_relu.1} parent=11 // pred_fallthru
        _
      // Predicated region
      $region17: #{conv_bn_relu.1} parent=11 // pred_check
        %p229 = pneg %p162
      $region18: #{conv_bn_relu.1} parent=11 // pred_check_branch
        %231 = sbr.rel (%p229) target = $region20
      $region19: #{conv_bn_relu.1} parent=11 // pred_region
        _
      $region20: #{conv_bn_relu.1} parent=11 // pred_fallthru
        _
      // Predicated region
      $region21: #{conv_bn_relu.1} parent=11 // pred_check
        %p232 = pneg %p183
      $region22: #{conv_bn_relu.1} parent=11 // pred_check_branch
        %234 = sbr.rel (%p232) target = $region24
      $region23: #{conv_bn_relu.1} parent=11 // pred_region
        _
      $region24: #{conv_bn_relu.1} parent=11 // pred_fallthru
        _
    $region12: #{conv_bn_relu.1} parent=5 // pred_fallthru
      _
    %p235 = scmp.lt.s32.totalorder %s12, 4
    // Predicated region
    $region25: #{conv_bn_relu.1} parent=5 // pred_check
      %p236 = pneg %p235
    $region26: #{conv_bn_relu.1} parent=5 // pred_check_branch
      %238 = sbr.rel (%p236) target = $region28
    $region27: #{conv_bn_relu.1} parent=5 // pred_region
      // Predicated region
      $region29: #{conv_bn_relu.1} parent=27 // pred_check
        %p239 = pneg %p52
      $region30: #{conv_bn_relu.1} parent=27 // pred_check_branch
        %241 = sbr.rel (%p239) target = $region32
      $region31: #{conv_bn_relu.1} parent=27 // pred_region
        %s242 = ssub.s32 %s20, 1
        %p243 = scmp.gt.s32.totalorder %s242, 0
        %s244 = scalar_select %p243, %s242, 0
        %s245 = smul.u32 2, %s244
        %p246 = scmp.lt.s32.totalorder %s19, 1
        %s247 = scalar_select %p246, %s19, 1
        %p248 = scmp.lt.s32.totalorder %s245, 3
        %s249 = scalar_select %p248, %s245, 3
        %s250 = smul.addr %s247, 4
        %s251 = sadd.s32 %s249, %s250
        %s252 = smul.addr %s251, 4
        %s253 = scalar_lea.vmem %s0, %s252
        %s254 = ssub.s32 %s20, 1
        %p255 = scmp.gt.s32.totalorder %s254, 0
        %s256 = scalar_select %p255, %s254, 0
        %s257 = smul.u32 2, %s256
      $region32: #{conv_bn_relu.1} parent=27 // pred_fallthru
        _
      // Predicated region
      $region33: #{conv_bn_relu.1} parent=27 // pred_check
        %p258 = pneg %p80
      $region34: #{conv_bn_relu.1} parent=27 // pred_check_branch
        %260 = sbr.rel (%p258) target = $region36
      $region35: #{conv_bn_relu.1} parent=27 // pred_region
        %s261 = smul.u32 2, %s20
        %p262 = scmp.lt.s32.totalorder %s19, 1
        %s263 = scalar_select %p262, %s19, 1
        %p264 = scmp.lt.s32.totalorder %s261, 3
        %s265 = scalar_select %p264, %s261, 3
        %s266 = smul.addr %s263, 4
        %s267 = sadd.s32 %s265, %s266
        %s268 = smul.addr %s267, 4
        %s269 = scalar_lea.vmem %s1, %s268
        %s270 = smul.u32 2, %s20
      $region36: #{conv_bn_relu.1} parent=27 // pred_fallthru
        _
      // Predicated region
      $region37: #{conv_bn_relu.1} parent=27 // pred_check
        %p271 = pneg %p114
      $region38: #{conv_bn_relu.1} parent=27 // pred_check_branch
        %273 = sbr.rel (%p271) target = $region40
      $region39: #{conv_bn_relu.1} parent=27 // pred_region
        %s274 = sadd.s32 %s20, 1
        %p275 = scmp.lt.s32.totalorder %s274, 1
        %s276 = scalar_select %p275, %s274, 1
        %s277 = smul.u32 2, %s276
        %p278 = scmp.lt.s32.totalorder %s19, 1
        %s279 = scalar_select %p278, %s19, 1
        %p280 = scmp.lt.s32.totalorder %s277, 3
        %s281 = scalar_select %p280, %s277, 3
        %s282 = smul.addr %s279, 4
        %s283 = sadd.s32 %s281, %s282
        %s284 = smul.addr %s283, 4
        %s285 = scalar_lea.vmem %s2, %s284
        %s286 = sadd.s32 %s20, 1
        %p287 = scmp.lt.s32.totalorder %s286, 1
        %s288 = scalar_select %p287, %s286, 1
        %s289 = smul.u32 2, %s288
      $region40: #{conv_bn_relu.1} parent=27 // pred_fallthru
        _
    $region28: #{conv_bn_relu.1} parent=5 // pred_fallthru
      _
    %p290 = scmp.le.s32.totalorder 1, %s12
    %p291 = scmp.lt.s32.totalorder %s12, 5
    %p292 = pnand %p290, %p291
    %p293 = pneg %p292
    // Predicated region
    $region41: #{conv_bn_relu.1} parent=5 // pred_check
      _
    $region42: #{conv_bn_relu.1} parent=5 // pred_check_branch
      %295 = sbr.rel (%p292) target = $region44
    $region43: #{conv_bn_relu.1} parent=5 // pred_region
      %s296 = ssub.s32 %s12, 1
      %s297 = ssub.s32 %s22, 1
      %p298 = scmp.gt.s32.totalorder %s297, 0
      %s299 = scalar_select %p298, %s297, 0
      %s300 = smul.u32 2, %s299
      %p301 = scmp.lt.s32.totalorder %s21, 1
      %s302 = scalar_select %p301, %s21, 1
      %p303 = scmp.lt.s32.totalorder %s300, 3
      %s304 = scalar_select %p303, %s300, 3
      %s305 = smul.addr %s302, 4
      %s306 = sadd.s32 %s304, %s305
      %s307 = smul.addr %s306, 4
      %s308 = scalar_lea.vmem %s0, %s307
      %p309 = pneg %p58
      %p310 = pneg %p55
      %s311 = smul.u32 2, %s22
      %p312 = scmp.lt.s32.totalorder %s21, 1
      %s313 = scalar_select %p312, %s21, 1
      %p314 = scmp.lt.s32.totalorder %s311, 3
      %s315 = scalar_select %p314, %s311, 3
      %s316 = smul.addr %s313, 4
      %s317 = sadd.s32 %s315, %s316
      %s318 = smul.addr %s317, 4
      %s319 = scalar_lea.vmem %s1, %s318
      %p320 = pneg %p86
      %p321 = pneg %p83
      %s322 = sadd.s32 %s22, 1
      %p323 = scmp.lt.s32.totalorder %s322, 1
      %s324 = scalar_select %p323, %s322, 1
      %s325 = smul.u32 2, %s324
      %p326 = scmp.lt.s32.totalorder %s21, 1
      %s327 = scalar_select %p326, %s21, 1
      %p328 = scmp.lt.s32.totalorder %s325, 3
      %s329 = scalar_select %p328, %s325, 3
      %s330 = smul.addr %s327, 4
      %s331 = sadd.s32 %s329, %s330
      %s332 = smul.addr %s331, 4
      %s333 = scalar_lea.vmem %s2, %s332
      %p334 = pneg %p120
      %p335 = pneg %p117
      %p336 = pneg %p141
      %p337 = pneg %p138
      %p338 = pneg %p162
      %p339 = pneg %p159
      %p340 = pneg %p183
      %p341 = pneg %p180
      %p342 = pneg %p211
      %p343 = pneg %p208
      %s344 = smul.u32 2, %s22
      %p345 = scmp.lt.s32.totalorder %s21, 1
      %s346 = scalar_select %p345, %s21, 1
      %p347 = scmp.lt.s32.totalorder %s344, 3
      %s348 = scalar_select %p347, %s344, 3
      %s349 = smul.addr %s346, 4
      %s350 = sadd.s32 %s348, %s349
      %s351 = smul.addr %s350, 8
      %s352 = scalar_lea.vmem %s6, %s351
      %s353 = ssub.s32 %s22, 1
      %p354 = scmp.gt.s32.totalorder %s353, 0
      %s355 = scalar_select %p354, %s353, 0
      %s356 = smul.u32 2, %s355
      %p357 = scmp.lt.s32.totalorder %s21, 1
      %s358 = scalar_select %p357, %s21, 1
      %p359 = scmp.lt.s32.totalorder %s356, 3
      %s360 = scalar_select %p359, %s356, 3
      %s361 = smul.addr %s358, 4
      %s362 = sadd.s32 %s360, %s361
      %s363 = smul.addr %s362, 4
      %s364 = scalar_lea.vmem %s0, %s363
      %s365 = ssub.s32 %s22, 1
      %p366 = scmp.gt.s32.totalorder %s365, 0
      %s367 = scalar_select %p366, %s365, 0
      %s368 = smul.u32 2, %s367
      %s369 = smul.u32 2, %s22
      %p370 = scmp.lt.s32.totalorder %s21, 1
      %s371 = scalar_select %p370, %s21, 1
      %p372 = scmp.lt.s32.totalorder %s369, 3
      %s373 = scalar_select %p372, %s369, 3
      %s374 = smul.addr %s371, 4
      %s375 = sadd.s32 %s373, %s374
      %s376 = smul.addr %s375, 4
      %s377 = scalar_lea.vmem %s1, %s376
      %s378 = smul.u32 2, %s22
      %s379 = sadd.s32 %s22, 1
      %p380 = scmp.lt.s32.totalorder %s379, 1
      %s381 = scalar_select %p380, %s379, 1
      %s382 = smul.u32 2, %s381
      %p383 = scmp.lt.s32.totalorder %s21, 1
      %s384 = scalar_select %p383, %s21, 1
      %p385 = scmp.lt.s32.totalorder %s382, 3
      %s386 = scalar_select %p385, %s382, 3
      %s387 = smul.addr %s384, 4
      %s388 = sadd.s32 %s386, %s387
      %s389 = smul.addr %s388, 4
      %s390 = scalar_lea.vmem %s2, %s389
      %s391 = sadd.s32 %s22, 1
      %p392 = scmp.lt.s32.totalorder %s391, 1
      %s393 = scalar_select %p392, %s391, 1
      %s394 = smul.u32 2, %s393
      %s395 = smul.u32 2, %s22
      %p396 = scmp.lt.s32.totalorder %s21, 1
      %s397 = scalar_select %p396, %s21, 1
      %p398 = scmp.lt.s32.totalorder %s395, 3
      %s399 = scalar_select %p398, %s395, 3
      %s400 = smul.addr %s397, 4
      %s401 = sadd.s32 %s399, %s400
      %s402 = smul.addr %s401, 8
      %s403 = scalar_lea.vmem %s6, %s402
      %s404 = smul.u32 2, %s22
      %v406 = vld [vmem:[%s364] sm:$0xff]
      %v407 = vld [vmem:[%s377] sm:$0xff]
      %v408 = vld [vmem:[%s390] sm:$0xff]
      %v410 = vunpack.c.h.b16 %v406
      %v411 = vpack.c.b16 %v410, %v410
      %v413 = vunpack.c.l.b16 %v407
      %v414 = vunpack.c.h.b16 %v407
      %v415 = vpack.c.b16 %v413, %v413
      %v416 = vpack.c.b16 %v414, %v414
      %v418 = vunpack.c.l.b16 %v408
      %v419 = vpack.c.b16 %v418, %v418
      %v420 = vld [vmem:[%s3] sm:$0xf]
      %v422 = vunpack.c.l.b16 %v420
      %v423 = vpack.c.b16 %v422, %v422
      %424 = vrot.lane.b32.xlu0 %v423, 120
      %v425 = vpop.permute.xlu0 %424
      %426 = vrot.lane.b32.xlu0 %v411, 18
      %v427 = vpop.permute.xlu0 %426
      %428 = vrot.lane.b32.xlu0 %v415, 18
      %v429 = vpop.permute.xlu0 %428
      %430 = vrot.lane.b32.xlu0 %v416, 18
      %v431 = vpop.permute.xlu0 %430
      %vm432 = vcmask 146432
      %v433 = vsel %vm432, %v427, %v429
      %v434 = vsel %vm432, %v429, %v431
      %vm435 = vcmask 64512
      %v437 = vsel %vm435, %v425, 0
      %vm439 = vcmask 1043456
      %v441 = vsel %vm439, %v433, 0
      %v444 = vsel %vm439, %v434, 0
      %446 = vmatprep.subr.bf16.mxu0 %v444
      %447 = vmatpush1.bf16.msra.mxu0 %v441
      %448 = vmatprep.subr.bf16.mxu0 0
      %449 = vmatpush1.bf16.msra.mxu0 0
      %450 = vmatprep.subr.bf16.mxu0 0
      %451 = vmatpush1.bf16.msra.mxu0 0
      %452 = vmatprep.subr.bf16.mxu0 0
      %453 = vmatpush1.bf16.msra.mxu0 0
      %454 = vmatprep.subr.bf16.mxu0 0
      %455 = vmatpush1.bf16.msra.mxu0 0
      %456 = vmatprep.subr.bf16.mxu0 0
      %457 = vmatpush1.bf16.msra.mxu0 0
      %458 = vmatprep.subr.bf16.mxu0 0
      %459 = vmatpush1.bf16.msra.mxu0 0
      %460 = vmatprep.subr.bf16.mxu0 0
      %461 = vmatpush1.bf16.msra.mxu0 0
      %462 = vmatprep.subr.bf16.mxu0 0
      %463 = vmatpush1.bf16.msra.mxu0 0
      %464 = vmatprep.subr.bf16.mxu0 0
      %465 = vmatpush1.bf16.msra.mxu0 0
      %466 = vmatprep.subr.bf16.mxu0 0
      %467 = vmatpush1.bf16.msra.mxu0 0
      %468 = vmatprep.subr.bf16.mxu0 0
      %469 = vmatpush1.bf16.msra.mxu0 0
      %470 = vmatprep.subr.bf16.mxu0 0
      %471 = vmatpush1.bf16.msra.mxu0 0
      %472 = vmatprep.subr.bf16.mxu0 0
      %473 = vmatpush1.bf16.msra.mxu0 0
      %474 = vmatprep.subr.bf16.mxu0 0
      %475 = vmatpush1.bf16.msra.mxu0 0
      %476 = vmatprep.subr.bf16.mxu0 0
      %477 = vmatpush1.bf16.msra.mxu0 0
      %478 = vmatprep.mubr.bf16.mxu0 0
      %479 = vmatmul.mubr.bf16.gmra.mrb[0].mxu0 %v437
      %v480 = vpop.f32.mrb[0].mxu0
      %v481 = vadd.f32 0.0, %v480
      %v482 = vpop.f32.mrb[0].mxu0
      %v483 = vadd.f32 0.0, %v482
      %v484 = vpop.f32.mrb[0].mxu0
      %v485 = vpop.f32.mrb[0].mxu0
      %486 = vdwg.mxu0
      %487 = vrot.lane.b32.xlu0 %v411, 19
      %v488 = vpop.permute.xlu0 %487
      %489 = vrot.lane.b32.xlu0 %v415, 19
      %v490 = vpop.permute.xlu0 %489
      %491 = vrot.lane.b32.xlu0 %v416, 19
      %v492 = vpop.permute.xlu0 %491
      %vm493 = vcmask 154624
      %v494 = vsel %vm493, %v488, %v490
      %v495 = vsel %vm493, %v490, %v492
      %v497 = vsel %vm435, %v420, 0
      %v500 = vsel %vm439, %v494, 0
      %v503 = vsel %vm439, %v495, 0
      %505 = vmatprep.subr.bf16.mxu0 %v503
      %506 = vmatpush1.bf16.msra.mxu0 %v500
      %507 = vmatprep.subr.bf16.mxu0 0
      %508 = vmatpush1.bf16.msra.mxu0 0
      %509 = vmatprep.subr.bf16.mxu0 0
      %510 = vmatpush1.bf16.msra.mxu0 0
      %511 = vmatprep.subr.bf16.mxu0 0
      %512 = vmatpush1.bf16.msra.mxu0 0
      %513 = vmatprep.subr.bf16.mxu0 0
      %514 = vmatpush1.bf16.msra.mxu0 0
      %515 = vmatprep.subr.bf16.mxu0 0
      %516 = vmatpush1.bf16.msra.mxu0 0
      %517 = vmatprep.subr.bf16.mxu0 0
      %518 = vmatpush1.bf16.msra.mxu0 0
      %519 = vmatprep.subr.bf16.mxu0 0
      %520 = vmatpush1.bf16.msra.mxu0 0
      %521 = vmatprep.subr.bf16.mxu0 0
      %522 = vmatpush1.bf16.msra.mxu0 0
      %523 = vmatprep.subr.bf16.mxu0 0
      %524 = vmatpush1.bf16.msra.mxu0 0
      %525 = vmatprep.subr.bf16.mxu0 0
      %526 = vmatpush1.bf16.msra.mxu0 0
      %527 = vmatprep.subr.bf16.mxu0 0
      %528 = vmatpush1.bf16.msra.mxu0 0
      %529 = vmatprep.subr.bf16.mxu0 0
      %530 = vmatpush1.bf16.msra.mxu0 0
      %531 = vmatprep.subr.bf16.mxu0 0
      %532 = vmatpush1.bf16.msra.mxu0 0
      %533 = vmatprep.subr.bf16.mxu0 0
      %534 = vmatpush1.bf16.msra.mxu0 0
      %535 = vmatprep.subr.bf16.mxu0 0
      %536 = vmatpush1.bf16.msra.mxu0 0
      %537 = vmatprep.mubr.bf16.mxu0 0
      %538 = vmatmul.mubr.bf16.gmra.mrb[0].mxu0 %v497
      %v539 = vpop.f32.mrb[0].mxu0
      %v540 = vadd.f32 %v481, %v539
      %v541 = vpop.f32.mrb[0].mxu0
      %v542 = vadd.f32 %v483, %v541
      %v543 = vpop.f32.mrb[0].mxu0
      %v544 = vpop.f32.mrb[0].mxu0
      %545 = vdwg.mxu0
      %546 = vrot.lane.b32.xlu0 %v423, 112
      %v547 = vpop.permute.xlu0 %546
      %548 = vrot.lane.b32.xlu0 %v411, 17
      %v549 = vpop.permute.xlu0 %548
      %550 = vrot.lane.b32.xlu0 %v415, 17
      %v551 = vpop.permute.xlu0 %550
      %552 = vrot.lane.b32.xlu0 %v416, 17
      %v553 = vpop.permute.xlu0 %552
      %vm554 = vcmask 138240
      %v555 = vsel %vm554, %v549, %v551
      %v556 = vsel %vm554, %v551, %v553
      %v558 = vsel %vm435, %v547, 0
      %v561 = vsel %vm439, %v555, 0
      %v564 = vsel %vm439, %v556, 0
      %566 = vmatprep.subr.bf16.mxu0 %v564
      %567 = vmatpush1.bf16.msra.mxu0 %v561
      %568 = vmatprep.subr.bf16.mxu0 0
      %569 = vmatpush1.bf16.msra.mxu0 0
      %570 = vmatprep.subr.bf16.mxu0 0
      %571 = vmatpush1.bf16.msra.mxu0 0
      %572 = vmatprep.subr.bf16.mxu0 0
      %573 = vmatpush1.bf16.msra.mxu0 0
      %574 = vmatprep.subr.bf16.mxu0 0
      %575 = vmatpush1.bf16.msra.mxu0 0
      %576 = vmatprep.subr.bf16.mxu0 0
      %577 = vmatpush1.bf16.msra.mxu0 0
      %578 = vmatprep.subr.bf16.mxu0 0
      %579 = vmatpush1.bf16.msra.mxu0 0
      %580 = vmatprep.subr.bf16.mxu0 0
      %581 = vmatpush1.bf16.msra.mxu0 0
      %582 = vmatprep.subr.bf16.mxu0 0
      %583 = vmatpush1.bf16.msra.mxu0 0
      %584 = vmatprep.subr.bf16.mxu0 0
      %585 = vmatpush1.bf16.msra.mxu0 0
      %586 = vmatprep.subr.bf16.mxu0 0
      %587 = vmatpush1.bf16.msra.mxu0 0
      %588 = vmatprep.subr.bf16.mxu0 0
      %589 = vmatpush1.bf16.msra.mxu0 0
      %590 = vmatprep.subr.bf16.mxu0 0
      %591 = vmatpush1.bf16.msra.mxu0 0
      %592 = vmatprep.subr.bf16.mxu0 0
      %593 = vmatpush1.bf16.msra.mxu0 0
      %594 = vmatprep.subr.bf16.mxu0 0
      %595 = vmatpush1.bf16.msra.mxu0 0
      %596 = vmatprep.subr.bf16.mxu0 0
      %597 = vmatpush1.bf16.msra.mxu0 0
      %598 = vmatprep.mubr.bf16.mxu0 0
      %599 = vmatmul.mubr.bf16.gmra.mrb[0].mxu0 %v558
      %v600 = vpop.f32.mrb[0].mxu0
      %v601 = vadd.f32 0.0, %v600
      %v602 = vpop.f32.mrb[0].mxu0
      %v603 = vadd.f32 0.0, %v602
      %v604 = vpop.f32.mrb[0].mxu0
      %v605 = vpop.f32.mrb[0].mxu0
      %606 = vdwg.mxu0
      %v607 = vadd.f32 %v540, %v601
      %v608 = vadd.f32 %v542, %v603
      %609 = vrot.lane.b32.xlu0 %v423, 104
      %v610 = vpop.permute.xlu0 %609
      %611 = vrot.lane.b32.xlu0 %v411, 1
      %v612 = vpop.permute.xlu0 %611
      %613 = vrot.lane.b32.xlu0 %v415, 1
      %v614 = vpop.permute.xlu0 %613
      %615 = vrot.lane.b32.xlu0 %v416, 1
      %v616 = vpop.permute.xlu0 %615
      %vm617 = vcmask 7168
      %v618 = vsel %vm617, %v612, %v614
      %v619 = vsel %vm617, %v614, %v616
      %v621 = vsel %vm435, %v610, 0
      %v624 = vsel %vm439, %v618, 0
      %v627 = vsel %vm439, %v619, 0
      %629 = vmatprep.subr.bf16.mxu0 %v627
      %630 = vmatpush1.bf16.msra.mxu0 %v624
      %631 = vmatprep.subr.bf16.mxu0 0
      %632 = vmatpush1.bf16.msra.mxu0 0
      %633 = vmatprep.subr.bf16.mxu0 0
      %634 = vmatpush1.bf16.msra.mxu0 0
      %635 = vmatprep.subr.bf16.mxu0 0
      %636 = vmatpush1.bf16.msra.mxu0 0
      %637 = vmatprep.subr.bf16.mxu0 0
      %638 = vmatpush1.bf16.msra.mxu0 0
      %639 = vmatprep.subr.bf16.mxu0 0
      %640 = vmatpush1.bf16.msra.mxu0 0
      %641 = vmatprep.subr.bf16.mxu0 0
      %642 = vmatpush1.bf16.msra.mxu0 0
      %643 = vmatprep.subr.bf16.mxu0 0
      %644 = vmatpush1.bf16.msra.mxu0 0
      %645 = vmatprep.subr.bf16.mxu0 0
      %646 = vmatpush1.bf16.msra.mxu0 0
      %647 = vmatprep.subr.bf16.mxu0 0
      %648 = vmatpush1.bf16.msra.mxu0 0
      %649 = vmatprep.subr.bf16.mxu0 0
      %650 = vmatpush1.bf16.msra.mxu0 0
      %651 = vmatprep.subr.bf16.mxu0 0
      %652 = vmatpush1.bf16.msra.mxu0 0
      %653 = vmatprep.subr.bf16.mxu0 0
      %654 = vmatpush1.bf16.msra.mxu0 0
      %655 = vmatprep.subr.bf16.mxu0 0
      %656 = vmatpush1.bf16.msra.mxu0 0
      %657 = vmatprep.subr.bf16.mxu0 0
      %658 = vmatpush1.bf16.msra.mxu0 0
      %659 = vmatprep.subr.bf16.mxu0 0
      %660 = vmatpush1.bf16.msra.mxu0 0
      %661 = vmatprep.mubr.bf16.mxu0 0
      %662 = vmatmul.mubr.bf16.gmra.mrb[0].mxu0 %v621
      %v663 = vpop.f32.mrb[0].mxu0
      %v664 = vadd.f32 0.0, %v663
      %v665 = vpop.f32.mrb[0].mxu0
      %v666 = vadd.f32 0.0, %v665
      %v667 = vpop.f32.mrb[0].mxu0
      %v668 = vpop.f32.mrb[0].mxu0
      %669 = vdwg.mxu0
      %v670 = vadd.f32 %v607, %v664
      %v671 = vadd.f32 %v608, %v666
      %672 = vrot.lane.b32.xlu0 %v423, 96
      %v673 = vpop.permute.xlu0 %672
      %v675 = vsel %vm435, %v673, 0
      %v678 = vsel %vm439, %v415, 0
      %v681 = vsel %vm439, %v416, 0
      %683 = vmatprep.subr.bf16.mxu0 %v681
      %684 = vmatpush1.bf16.msra.mxu0 %v678
      %685 = vmatprep.subr.bf16.mxu0 0
      %686 = vmatpush1.bf16.msra.mxu0 0
      %687 = vmatprep.subr.bf16.mxu0 0
      %688 = vmatpush1.bf16.msra.mxu0 0
      %689 = vmatprep.subr.bf16.mxu0 0
      %690 = vmatpush1.bf16.msra.mxu0 0
      %691 = vmatprep.subr.bf16.mxu0 0
      %692 = vmatpush1.bf16.msra.mxu0 0
      %693 = vmatprep.subr.bf16.mxu0 0
      %694 = vmatpush1.bf16.msra.mxu0 0
      %695 = vmatprep.subr.bf16.mxu0 0
      %696 = vmatpush1.bf16.msra.mxu0 0
      %697 = vmatprep.subr.bf16.mxu0 0
      %698 = vmatpush1.bf16.msra.mxu0 0
      %699 = vmatprep.subr.bf16.mxu0 0
      %700 = vmatpush1.bf16.msra.mxu0 0
      %701 = vmatprep.subr.bf16.mxu0 0
      %702 = vmatpush1.bf16.msra.mxu0 0
      %703 = vmatprep.subr.bf16.mxu0 0
      %704 = vmatpush1.bf16.msra.mxu0 0
      %705 = vmatprep.subr.bf16.mxu0 0
      %706 = vmatpush1.bf16.msra.mxu0 0
      %707 = vmatprep.subr.bf16.mxu0 0
      %708 = vmatpush1.bf16.msra.mxu0 0
      %709 = vmatprep.subr.bf16.mxu0 0
      %710 = vmatpush1.bf16.msra.mxu0 0
      %711 = vmatprep.subr.bf16.mxu0 0
      %712 = vmatpush1.bf16.msra.mxu0 0
      %713 = vmatprep.subr.bf16.mxu0 0
      %714 = vmatpush1.bf16.msra.mxu0 0
      %715 = vmatprep.mubr.bf16.mxu0 0
      %716 = vmatmul.mubr.bf16.gmra.mrb[0].mxu0 %v675
      %v717 = vpop.f32.mrb[0].mxu0
      %v718 = vadd.f32 0.0, %v717
      %v719 = vpop.f32.mrb[0].mxu0
      %v720 = vadd.f32 0.0, %v719
      %v721 = vpop.f32.mrb[0].mxu0
      %v722 = vpop.f32.mrb[0].mxu0
      %723 = vdwg.mxu0
      %v724 = vadd.f32 %v670, %v718
      %v725 = vadd.f32 %v671, %v720
      %726 = vrot.lane.b32.xlu0 %v423, 88
      %v727 = vpop.permute.xlu0 %726
      %728 = vrot.lane.b32.xlu0 %v415, 127
      %v729 = vpop.permute.xlu0 %728
      %730 = vrot.lane.b32.xlu0 %v416, 127
      %v731 = vpop.permute.xlu0 %730
      %732 = vrot.lane.b32.xlu0 %v419, 127
      %v733 = vpop.permute.xlu0 %732
      %vm734 = vcmask 1039360
      %v735 = vsel %vm734, %v729, %v731
      %v736 = vsel %vm734, %v731, %v733
      %v738 = vsel %vm435, %v727, 0
      %v741 = vsel %vm439, %v735, 0
      %v744 = vsel %vm439, %v736, 0
      %746 = vmatprep.subr.bf16.mxu0 %v744
      %747 = vmatpush1.bf16.msra.mxu0 %v741
      %748 = vmatprep.subr.bf16.mxu0 0
      %749 = vmatpush1.bf16.msra.mxu0 0
      %750 = vmatprep.subr.bf16.mxu0 0
      %751 = vmatpush1.bf16.msra.mxu0 0
      %752 = vmatprep.subr.bf16.mxu0 0
      %753 = vmatpush1.bf16.msra.mxu0 0
      %754 = vmatprep.subr.bf16.mxu0 0
      %755 = vmatpush1.bf16.msra.mxu0 0
      %756 = vmatprep.subr.bf16.mxu0 0
      %757 = vmatpush1.bf16.msra.mxu0 0
      %758 = vmatprep.subr.bf16.mxu0 0
      %759 = vmatpush1.bf16.msra.mxu0 0
      %760 = vmatprep.subr.bf16.mxu0 0
      %761 = vmatpush1.bf16.msra.mxu0 0
      %762 = vmatprep.subr.bf16.mxu0 0
      %763 = vmatpush1.bf16.msra.mxu0 0
      %764 = vmatprep.subr.bf16.mxu0 0
      %765 = vmatpush1.bf16.msra.mxu0 0
      %766 = vmatprep.subr.bf16.mxu0 0
      %767 = vmatpush1.bf16.msra.mxu0 0
      %768 = vmatprep.subr.bf16.mxu0 0
      %769 = vmatpush1.bf16.msra.mxu0 0
      %770 = vmatprep.subr.bf16.mxu0 0
      %771 = vmatpush1.bf16.msra.mxu0 0
      %772 = vmatprep.subr.bf16.mxu0 0
      %773 = vmatpush1.bf16.msra.mxu0 0
      %774 = vmatprep.subr.bf16.mxu0 0
      %775 = vmatpush1.bf16.msra.mxu0 0
      %776 = vmatprep.subr.bf16.mxu0 0
      %777 = vmatpush1.bf16.msra.mxu0 0
      %778 = vmatprep.mubr.bf16.mxu0 0
      %779 = vmatmul.mubr.bf16.gmra.mrb[0].mxu0 %v738
      %v780 = vpop.f32.mrb[0].mxu0
      %v781 = vadd.f32 0.0, %v780
      %v782 = vpop.f32.mrb[0].mxu0
      %v783 = vadd.f32 0.0, %v782
      %v784 = vpop.f32.mrb[0].mxu0
      %v785 = vpop.f32.mrb[0].mxu0
      %786 = vdwg.mxu0
      %v787 = vadd.f32 %v724, %v781
      %v788 = vadd.f32 %v725, %v783
      %789 = vrot.lane.b32.xlu0 %v423, 80
      %v790 = vpop.permute.xlu0 %789
      %791 = vrot.lane.b32.xlu0 %v415, 111
      %v792 = vpop.permute.xlu0 %791
      %793 = vrot.lane.b32.xlu0 %v416, 111
      %v794 = vpop.permute.xlu0 %793
      %795 = vrot.lane.b32.xlu0 %v419, 111
      %v796 = vpop.permute.xlu0 %795
      %vm797 = vcmask 908288
      %v798 = vsel %vm797, %v792, %v794
      %v799 = vsel %vm797, %v794, %v796
      %v801 = vsel %vm435, %v790, 0
      %v804 = vsel %vm439, %v798, 0
      %v807 = vsel %vm439, %v799, 0
      %809 = vmatprep.subr.bf16.mxu0 %v807
      %810 = vmatpush1.bf16.msra.mxu0 %v804
      %811 = vmatprep.subr.bf16.mxu0 0
      %812 = vmatpush1.bf16.msra.mxu0 0
      %813 = vmatprep.subr.bf16.mxu0 0
      %814 = vmatpush1.bf16.msra.mxu0 0
      %815 = vmatprep.subr.bf16.mxu0 0
      %816 = vmatpush1.bf16.msra.mxu0 0
      %817 = vmatprep.subr.bf16.mxu0 0
      %818 = vmatpush1.bf16.msra.mxu0 0
      %819 = vmatprep.subr.bf16.mxu0 0
      %820 = vmatpush1.bf16.msra.mxu0 0
      %821 = vmatprep.subr.bf16.mxu0 0
      %822 = vmatpush1.bf16.msra.mxu0 0
      %823 = vmatprep.subr.bf16.mxu0 0
      %824 = vmatpush1.bf16.msra.mxu0 0
      %825 = vmatprep.subr.bf16.mxu0 0
      %826 = vmatpush1.bf16.msra.mxu0 0
      %827 = vmatprep.subr.bf16.mxu0 0
      %828 = vmatpush1.bf16.msra.mxu0 0
      %829 = vmatprep.subr.bf16.mxu0 0
      %830 = vmatpush1.bf16.msra.mxu0 0
      %831 = vmatprep.subr.bf16.mxu0 0
      %832 = vmatpush1.bf16.msra.mxu0 0
      %833 = vmatprep.subr.bf16.mxu0 0
      %834 = vmatpush1.bf16.msra.mxu0 0
      %835 = vmatprep.subr.bf16.mxu0 0
      %836 = vmatpush1.bf16.msra.mxu0 0
      %837 = vmatprep.subr.bf16.mxu0 0
      %838 = vmatpush1.bf16.msra.mxu0 0
      %839 = vmatprep.subr.bf16.mxu0 0
      %840 = vmatpush1.bf16.msra.mxu0 0
      %841 = vmatprep.mubr.bf16.mxu0 0
      %842 = vmatmul.mubr.bf16.gmra.mrb[0].mxu0 %v801
      %v843 = vpop.f32.mrb[0].mxu0
      %v844 = vadd.f32 0.0, %v843
      %v845 = vpop.f32.mrb[0].mxu0
      %v846 = vadd.f32 0.0, %v845
      %v847 = vpop.f32.mrb[0].mxu0
      %v848 = vpop.f32.mrb[0].mxu0
      %849 = vdwg.mxu0
      %v850 = vadd.f32 %v787, %v844
      %v851 = vadd.f32 %v788, %v846
      %852 = vrot.lane.b32.xlu0 %v423, 72
      %v853 = vpop.permute.xlu0 %852
      %854 = vrot.lane.b32.xlu0 %v415, 110
      %v855 = vpop.permute.xlu0 %854
      %856 = vrot.lane.b32.xlu0 %v416, 110
      %v857 = vpop.permute.xlu0 %856
      %858 = vrot.lane.b32.xlu0 %v419, 110
      %v859 = vpop.permute.xlu0 %858
      %vm860 = vcmask 900096
      %v861 = vsel %vm860, %v855, %v857
      %v862 = vsel %vm860, %v857, %v859
      %v864 = vsel %vm435, %v853, 0
      %v867 = vsel %vm439, %v861, 0
      %v870 = vsel %vm439, %v862, 0
      %872 = vmatprep.subr.bf16.mxu0 %v870
      %873 = vmatpush1.bf16.msra.mxu0 %v867
      %874 = vmatprep.subr.bf16.mxu0 0
      %875 = vmatpush1.bf16.msra.mxu0 0
      %876 = vmatprep.subr.bf16.mxu0 0
      %877 = vmatpush1.bf16.msra.mxu0 0
      %878 = vmatprep.subr.bf16.mxu0 0
      %879 = vmatpush1.bf16.msra.mxu0 0
      %880 = vmatprep.subr.bf16.mxu0 0
      %881 = vmatpush1.bf16.msra.mxu0 0
      %882 = vmatprep.subr.bf16.mxu0 0
      %883 = vmatpush1.bf16.msra.mxu0 0
      %884 = vmatprep.subr.bf16.mxu0 0
      %885 = vmatpush1.bf16.msra.mxu0 0
      %886 = vmatprep.subr.bf16.mxu0 0
      %887 = vmatpush1.bf16.msra.mxu0 0
      %888 = vmatprep.subr.bf16.mxu0 0
      %889 = vmatpush1.bf16.msra.mxu0 0
      %890 = vmatprep.subr.bf16.mxu0 0
      %891 = vmatpush1.bf16.msra.mxu0 0
      %892 = vmatprep.subr.bf16.mxu0 0
      %893 = vmatpush1.bf16.msra.mxu0 0
      %894 = vmatprep.subr.bf16.mxu0 0
      %895 = vmatpush1.bf16.msra.mxu0 0
      %896 = vmatprep.subr.bf16.mxu0 0
      %897 = vmatpush1.bf16.msra.mxu0 0
      %898 = vmatprep.subr.bf16.mxu0 0
      %899 = vmatpush1.bf16.msra.mxu0 0
      %900 = vmatprep.subr.bf16.mxu0 0
      %901 = vmatpush1.bf16.msra.mxu0 0
      %902 = vmatprep.subr.bf16.mxu0 0
      %903 = vmatpush1.bf16.msra.mxu0 0
      %904 = vmatprep.mubr.bf16.mxu0 0
      %905 = vmatmul.mubr.bf16.gmra.mrb[0].mxu0 %v864
      %v906 = vpop.f32.mrb[0].mxu0
      %v907 = vadd.f32 0.0, %v906
      %v908 = vpop.f32.mrb[0].mxu0
      %v909 = vadd.f32 0.0, %v908
      %v910 = vpop.f32.mrb[0].mxu0
      %v911 = vpop.f32.mrb[0].mxu0
      %912 = vdwg.mxu0
      %v913 = vadd.f32 %v850, %v907
      %v914 = vadd.f32 %v851, %v909
      %915 = vrot.lane.b32.xlu0 %v423, 64
      %v916 = vpop.permute.xlu0 %915
      %917 = vrot.lane.b32.xlu0 %v415, 109
      %v918 = vpop.permute.xlu0 %917
      %919 = vrot.lane.b32.xlu0 %v416, 109
      %v920 = vpop.permute.xlu0 %919
      %921 = vrot.lane.b32.xlu0 %v419, 109
      %v922 = vpop.permute.xlu0 %921
      %vm923 = vcmask 891904
      %v924 = vsel %vm923, %v918, %v920
      %v925 = vsel %vm923, %v920, %v922
      %v927 = vsel %vm435, %v916, 0
      %v930 = vsel %vm439, %v924, 0
      %v933 = vsel %vm439, %v925, 0
      %935 = vmatprep.subr.bf16.mxu0 %v933
      %936 = vmatpush1.bf16.msra.mxu0 %v930
      %937 = vmatprep.subr.bf16.mxu0 0
      %938 = vmatpush1.bf16.msra.mxu0 0
      %939 = vmatprep.subr.bf16.mxu0 0
      %940 = vmatpush1.bf16.msra.mxu0 0
      %941 = vmatprep.subr.bf16.mxu0 0
      %942 = vmatpush1.bf16.msra.mxu0 0
      %943 = vmatprep.subr.bf16.mxu0 0
      %944 = vmatpush1.bf16.msra.mxu0 0
      %945 = vmatprep.subr.bf16.mxu0 0
      %946 = vmatpush1.bf16.msra.mxu0 0
      %947 = vmatprep.subr.bf16.mxu0 0
      %948 = vmatpush1.bf16.msra.mxu0 0
      %949 = vmatprep.subr.bf16.mxu0 0
      %950 = vmatpush1.bf16.msra.mxu0 0
      %951 = vmatprep.subr.bf16.mxu0 0
      %952 = vmatpush1.bf16.msra.mxu0 0
      %953 = vmatprep.subr.bf16.mxu0 0
      %954 = vmatpush1.bf16.msra.mxu0 0
      %955 = vmatprep.subr.bf16.mxu0 0
      %956 = vmatpush1.bf16.msra.mxu0 0
      %957 = vmatprep.subr.bf16.mxu0 0
      %958 = vmatpush1.bf16.msra.mxu0 0
      %959 = vmatprep.subr.bf16.mxu0 0
      %960 = vmatpush1.bf16.msra.mxu0 0
      %961 = vmatprep.subr.bf16.mxu0 0
      %962 = vmatpush1.bf16.msra.mxu0 0
      %963 = vmatprep.subr.bf16.mxu0 0
      %964 = vmatpush1.bf16.msra.mxu0 0
      %965 = vmatprep.subr.bf16.mxu0 0
      %966 = vmatpush1.bf16.msra.mxu0 0
      %967 = vmatprep.mubr.bf16.mxu0 0
      %968 = vmatmul.mubr.bf16.gmra.mrb[0].mxu0 %v927
      %v969 = vpop.f32.mrb[0].mxu0
      %v970 = vadd.f32 0.0, %v969
      %v971 = vpop.f32.mrb[0].mxu0
      %v972 = vadd.f32 0.0, %v971
      %v973 = vpop.f32.mrb[0].mxu0
      %v974 = vpop.f32.mrb[0].mxu0
      %975 = vdwg.mxu0
      %v976 = vadd.f32 %v913, %v970
      %v977 = vadd.f32 %v914, %v972
      %v978 = vld [vmem:[%s4] sm:$0xff]
      %980 = vset.pattern.permute.xlu0 0
      %981 = vperm.xlu0 %980, %v978
      %v982 = vpop.permute.xlu0 %981
      %v984 = vmul.f32 %v976, %v982
      %v985 = vmul.f32 %v977, %v982
      %v986 = vld [vmem:[%s5] sm:$0xff]
      %988 = vset.pattern.permute.xlu0 0
      %989 = vperm.xlu0 %988, %v986
      %v990 = vpop.permute.xlu0 %989
      %v992 = vadd.f32 %v984, %v990
      %v993 = vadd.f32 %v985, %v990
      %v994 = vmax.f32 %v992, 0.0
      %v995 = vmax.f32 %v993, 0.0
      %996 = vst [vmem:[%s403] sm:$0xff] %v994
      %997 = vst [vmem:[%s403 + $0x8] sm:$0xff] %v995
      %s998 = smul.u32 2, %s22
      %p999 = scmp.lt.s32.totalorder %s21, 1
      %s1000 = scalar_select %p999, %s21, 1
      %p1001 = scmp.lt.s32.totalorder %s998, 3
      %s1002 = scalar_select %p1001, %s998, 3
      %s1003 = smul.addr %s1000, 4
      %s1004 = sadd.s32 %s1002, %s1003
      %s1005 = smul.addr %s1004, 8
      %s1006 = scalar_lea.vmem %s6, %s1005
      // Predicated region
      $region45: #{conv_bn_relu.1} parent=43 // pred_check
        %p1007 = pneg %p208
      $region46: #{conv_bn_relu.1} parent=43 // pred_check_branch
        %1009 = sbr.rel (%p1007) target = $region48
      $region47: #{conv_bn_relu.1} parent=43 // pred_region
        %s1010 = smul.u32 2, %s22
      $region48: #{conv_bn_relu.1} parent=43 // pred_fallthru
        _
    $region44: #{conv_bn_relu.1} parent=5 // pred_fallthru
      _
    %p1011 = scmp.le.s32.totalorder 2, %s12
    // Predicated region
    $region49: #{conv_bn_relu.1} parent=5 // pred_check
      %p1012 = pneg %p1011
    $region50: #{conv_bn_relu.1} parent=5 // pred_check_branch
      %1014 = sbr.rel (%p1012) target = $region52
    $region51: #{conv_bn_relu.1} parent=5 // pred_region
      %s1015 = ssub.s32 %s12, 2
      // Predicated region
      $region53: #{conv_bn_relu.1} parent=51 // pred_check
        %p1016 = pneg %p214
      $region54: #{conv_bn_relu.1} parent=51 // pred_check_branch
        %1018 = sbr.rel (%p1016) target = $region56
      $region55: #{conv_bn_relu.1} parent=51 // pred_region
        %s1019 = smul.u32 2, %s24
        %p1020 = scmp.lt.s32.totalorder %s23, 1
        %s1021 = scalar_select %p1020, %s23, 1
        %p1022 = scmp.lt.s32.totalorder %s1019, 3
        %s1023 = scalar_select %p1022, %s1019, 3
        %s1024 = smul.addr %s1021, 4
        %s1025 = sadd.s32 %s1023, %s1024
        %s1026 = smul.addr %s1025, 8
        %s1027 = scalar_lea.vmem %s6, %s1026
      $region56: #{conv_bn_relu.1} parent=51 // pred_fallthru
        _
    $region52: #{conv_bn_relu.1} parent=5 // pred_fallthru
      _
  $region6: #{conv_bn_relu.1} parent=0 // loop_footer
    %s16 = sadd.s32 1, %s12
  $region7: #{conv_bn_relu.1} parent=0 // loop_footer_branch
    %11 = sbr.rel target = $region3
  $region8: #{conv_bn_relu.1} parent=0 // loop_exit
    _

</llo_original>
